<compile_context>
chip_gen: v7x
topology: tpu7x:2x2x1
jax: 0.10.0
libtpu: 0.0.40
codegen_flags: <defaults>
</compile_context>

<pallas_src>
from functools import partial

import jax
import jax.numpy as jnp
from jax.experimental import pallas as pl
from jax.experimental.pallas import tpu as pltpu

INPUT_FEATURES = 14
OUTPUT_FEATURES = 1

_PACK = 8                      # batch rows packed per (sublane) row — the f32 sublane granule
_DEFAULT_BLOCK_PACKED_ROWS = 8192   # 8192 packed rows = 65536 batch rows ≈ 3.6 MiB HBM / step


def _packed_linear_kernel(m_ref, b_ref, x_ref, o_ref):
    # m_ref: VMEM (PACK*IN, PACK*OUT) f32 — block-diagonal expanded weight (resident)
    # b_ref: VMEM (1, PACK*OUT) f32      — bias tiled PACK times (resident)
    # x_ref: VMEM (tb, PACK*IN) f32      — tb packed rows (each = PACK batch rows)
    # o_ref: VMEM (tb, PACK*OUT) f32
    acc = jnp.dot(
        x_ref[...], m_ref[...],
        preferred_element_type=jnp.float32,
        precision=jax.lax.Precision.HIGHEST,
    )
    o_ref[...] = (acc + b_ref[...]).astype(o_ref.dtype)


@partial(jax.jit, static_argnames=("block_rows", "min_pallas_batch"))
def bayesian_linear_regression_forward(x, weight, bias, *, block_rows=None,
                                       min_pallas_batch=1024):
    """x: (B, IN) f32, weight: (OUT, IN) f32, bias: (OUT,) f32 -> (B, OUT) f32."""
    B, IN = x.shape
    OUT = weight.shape[0]

    # Fast path: for tiny batches (launch overhead dominates) or batches that are
    # not a multiple of the 8-row packing granule, a single fused XLA op is one
    # HBM pass and strictly better than any kernel here.
    if B < min_pallas_batch or (B % _PACK) != 0:
        return jnp.dot(x, weight.T, precision=jax.lax.Precision.HIGHEST) + bias

    rows = B // _PACK                         # packed rows
    xp = x.reshape(rows, _PACK * IN)          # free row-major bitcast, no HBM copy

    # Block-diagonal weight expansion:  M[g*IN + k, g*OUT + o] = W[o, k].
    eye = jnp.eye(_PACK, dtype=x.dtype)
    m = (eye[:, None, :, None] * weight.T[None, :, None, :]).reshape(
        _PACK * IN, _PACK * OUT).astype(x.dtype)
    b_row = jnp.tile(bias.astype(x.dtype), _PACK).reshape(1, _PACK * OUT)

    if block_rows is None:
        block_rows = _DEFAULT_BLOCK_PACKED_ROWS
    if rows <= block_rows:
        tb = rows                              # single block equal to the full dim
    else:
        tb = max(_PACK, (block_rows // _PACK) * _PACK)   # keep sublane-aligned

    grid = (pl.cdiv(rows, tb),)

    out_packed = pl.pallas_call(
        _packed_linear_kernel,
        out_shape=jax.ShapeDtypeStruct((rows, _PACK * OUT), x.dtype),
        grid=grid,
        in_specs=[
            # Tiny parameters: full-array blocks with a constant index map stay
            # resident in VMEM across the grid.
            pl.BlockSpec((_PACK * IN, _PACK * OUT), lambda i: (0, 0)),
            pl.BlockSpec((1, _PACK * OUT), lambda i: (0, 0)),
            # Batch-tiled packed activations; last block may be partial (masked).
            pl.BlockSpec((tb, _PACK * IN), lambda i: (i, 0)),
        ],
        out_specs=pl.BlockSpec((tb, _PACK * OUT), lambda i: (i, 0)),
        compiler_params=pltpu.CompilerParams(
            dimension_semantics=("parallel",),
            vmem_limit_bytes=32 * 1024 * 1024,
        ),
    )(m, b_row, xp)

    # Free row-major bitcast back to nn.Linear's (B, OUT) layout.
    return out_packed.reshape(B, OUT)


if __name__ == "__main__":
    key = jax.random.PRNGKey(0)
    kx1, kx2, kx3, kw, kb = jax.random.split(key, 5)

    # Deterministic parameter init mirroring nn.Linear's default
    # U(-1/sqrt(fan_in), 1/sqrt(fan_in)).
    bound = 1.0 / (INPUT_FEATURES ** 0.5)
    weight = jax.random.uniform(
        kw, (OUTPUT_FEATURES, INPUT_FEATURES),
        minval=-bound, maxval=bound, dtype=jnp.float32)
    bias = jax.random.uniform(
        kb, (OUTPUT_FEATURES,), minval=-bound, maxval=bound, dtype=jnp.float32)

    def reference(xv):
        return jnp.dot(xv, weight.T, precision=jax.lax.Precision.HIGHEST) + bias

    # 1) Small batch forced through the Pallas kernel (single block).
    x1 = jax.random.normal(kx1, (8, INPUT_FEATURES), dtype=jnp.float32)
    y1 = jax.block_until_ready(
        bayesian_linear_regression_forward(x1, weight, bias, min_pallas_batch=0))
    assert y1.shape == (8, OUTPUT_FEATURES)
    assert jnp.allclose(y1, reference(x1), atol=1e-4, rtol=1e-4)

    # 2) Multi-step grid with a partial trailing block (125 packed rows, tile 32).
    x2 = jax.random.normal(kx2, (1000, INPUT_FEATURES), dtype=jnp.float32)
    y2 = jax.block_until_ready(
        bayesian_linear_regression_forward(x2, weight, bias,
                                           block_rows=32, min_pallas_batch=0))
    assert y2.shape == (1000, OUTPUT_FEATURES)
    assert jnp.allclose(y2, reference(x2), atol=1e-4, rtol=1e-4)

    # 3) Misaligned tiny batch goes down the fused-XLA fast path.
    x3 = jax.random.normal(kx3, (5, INPUT_FEATURES), dtype=jnp.float32)
    y3 = jax.block_until_ready(bayesian_linear_regression_forward(x3, weight, bias))
    assert y3.shape == (5, OUTPUT_FEATURES)
    assert jnp.allclose(y3, reference(x3), atol=1e-4, rtol=1e-4)

    print("KERNEL_OK")
</pallas_src>

<mosaic_0001>
module attributes {stable_mosaic.version = 11 : i64} {
  func.func @_packed_linear_kernel(%arg0: i32, %arg1: memref<112x8xf32, #tpu.memory_space<vmem>>, %arg2: memref<1x8xf32, #tpu.memory_space<vmem>>, %arg3: memref<1x112xf32, #tpu.memory_space<vmem>>, %arg4: memref<1x8xf32, #tpu.memory_space<vmem>>) attributes {dimension_semantics = [#tpu.dimension_semantics<parallel>], iteration_bounds = array<i64: 1>, scalar_prefetch = 0 : i64, scratch_operands = 0 : i64, tpu.core_type = #tpu.core_type<tc>, window_params = [{pipeline_mode = #tpu.pipeline_mode<synchronous>, transform_indices = @transform_0, window_bounds = array<i64: 112, 8>}, {pipeline_mode = #tpu.pipeline_mode<synchronous>, transform_indices = @transform_1, window_bounds = array<i64: 1, 8>}, {transform_indices = @transform_2, window_bounds = array<i64: 1, 112>}, {transform_indices = @transform_3, window_bounds = array<i64: 1, 8>}]} {
    %c0 = arith.constant 0 : index
    %c0_0 = arith.constant 0 : index
    %0 = vector.load %arg3[%c0, %c0_0] : memref<1x112xf32, #tpu.memory_space<vmem>>, vector<1x112xf32>
    %c0_1 = arith.constant 0 : index
    %c0_2 = arith.constant 0 : index
    %1 = vector.load %arg1[%c0_1, %c0_2] : memref<112x8xf32, #tpu.memory_space<vmem>>, vector<112x8xf32>
    %cst = arith.constant dense<0.000000e+00> : vector<1x8xf32>
    %2 = tpu.matmul %0, %1, %cst {dimension_numbers = #tpu.dot_dimension_numbers<[1], [0], [0], [1], [0, 0, 1, 1], [], []>, precision = #tpu.contract_precision<fp32>} : vector<1x112xf32>, vector<112x8xf32>, vector<1x8xf32> -> vector<1x8xf32>
    %c0_3 = arith.constant 0 : index
    %c0_4 = arith.constant 0 : index
    %3 = vector.load %arg2[%c0_3, %c0_4] : memref<1x8xf32, #tpu.memory_space<vmem>>, vector<1x8xf32>
    %4 = arith.addf %2, %3 : vector<1x8xf32>
    %c0_5 = arith.constant 0 : index
    %c0_6 = arith.constant 0 : index
    %5 = vector.load %arg4[%c0_5, %c0_6] : memref<1x8xf32, #tpu.memory_space<vmem>>, vector<1x8xf32>
    tpu.vector_store %arg4[%c0_5, %c0_6], %4 {strides = array<i32>} : memref<1x8xf32, #tpu.memory_space<vmem>>, vector<1x8xf32>,
    return
  }
  func.func @transform_0(%arg0: i32) -> (i32, i32) {
    %c0_i32 = arith.constant 0 : i32
    %c0_i32_0 = arith.constant 0 : i32
    %c0_i32_1 = arith.constant 0 : i32
    return %c0_i32, %c0_i32_0 : i32, i32
  }
  func.func @transform_1(%arg0: i32) -> (i32, i32) {
    %c0_i32 = arith.constant 0 : i32
    %c0_i32_0 = arith.constant 0 : i32
    %c0_i32_1 = arith.constant 0 : i32
    return %c0_i32, %c0_i32_0 : i32, i32
  }
  func.func @transform_2(%arg0: i32) -> (i32, i32) {
    %c0_i32 = arith.constant 0 : i32
    %c0_i32_0 = arith.constant 0 : i32
    return %arg0, %c0_i32 : i32, i32
  }
  func.func @transform_3(%arg0: i32) -> (i32, i32) {
    %c0_i32 = arith.constant 0 : i32
    %c0_i32_0 = arith.constant 0 : i32
    return %arg0, %c0_i32 : i32, i32
  }
}

</mosaic_0001>

<llo_original>
// kernel: bayesian_linear_regression_forward.1
$region0: #{bayesian_linear_regression_forward.1}
  #allocation0 [shape = 'u32[]', space=smem, size = 0x4, offset = 0x4, fixed_abs, tag = 'smem constant byte address 0x4 - core index']
  #allocation1 [shape = 'u32[144,128]{1,0:T(1,128)}', space=vmem, size = 0x12000, scoped, tag = 'internal scratch']
  %s0 = inlined_call_operand.vmem [shape: f32[112,8], index: 0, kind: input, shape index: {}]
  %s1 = inlined_call_operand.vmem [shape: f32[1,8], index: 1, kind: input, shape index: {}]
  %s2 = inlined_call_operand.vmem [shape: f32[1,112], index: 2, kind: input, shape index: {}]
  %s3 = inlined_call_operand.hbm [shape: f32[1,8], index: 3, kind: output, shape index: {}]
  %s4 = sld [smem:[#allocation0]]
  $region22: #{bayesian_linear_regression_forward.1} parent=0
    _
  %s6 = ssub.s32 1, %s4
  %s7 = scalar_select 0, %s6, %s4
  $region1: #{bayesian_linear_regression_forward.1} parent=0
    #allocation2 [shape = 'u8[512]{0}', space=vmem, size = 0x400, scoped, tag = 'output window, operand 0, single buffered']
    #allocation3 [shape = 's32[1]{0}', space=sflag, size = 0x4, scoped, tag = 'scoped memory for bayesian_linear_regression_forward.1']
    %8 = vsyncpa [#allocation3], 0
    // Predicated region
    $region2: #{bayesian_linear_regression_forward.1} parent=1 // pred_check
      _
    $region3: #{bayesian_linear_regression_forward.1} parent=1 // pred_check_branch
      %10 = sbr.rel (0) target = $region5
    $region4: #{bayesian_linear_regression_forward.1} parent=1 // pred_region
      _
    $region5: #{bayesian_linear_regression_forward.1} parent=1 // pred_fallthru
      _
    // Predicated region
    $region6: #{bayesian_linear_regression_forward.1} parent=1 // pred_check
      _
    $region7: #{bayesian_linear_regression_forward.1} parent=1 // pred_check_branch
      %12 = sbr.rel (0) target = $region9
    $region8: #{bayesian_linear_regression_forward.1} parent=1 // pred_region
      _
    $region9: #{bayesian_linear_regression_forward.1} parent=1 // pred_fallthru
      _
    // Predicated region
    $region10: #{bayesian_linear_regression_forward.1} parent=1 // pred_check
      _
    $region11: #{bayesian_linear_regression_forward.1} parent=1 // pred_check_branch
      %14 = sbr.rel (0) target = $region13
    $region12: #{bayesian_linear_regression_forward.1} parent=1 // pred_region
      _
    $region13: #{bayesian_linear_regression_forward.1} parent=1 // pred_fallthru
      _
    %v15 = vld [vmem:[%s2] sm:$0x1]
    %v16 = vld [vmem:[%s0] sm:$0xff]
    %v17 = vld [vmem:[%s0 + $0x8] sm:$0xff]
    %v18 = vld [vmem:[%s0 + $0x10] sm:$0xff]
    %v19 = vld [vmem:[%s0 + $0x18] sm:$0xff]
    %v20 = vld [vmem:[%s0 + $0x20] sm:$0xff]
    %v21 = vld [vmem:[%s0 + $0x28] sm:$0xff]
    %v22 = vld [vmem:[%s0 + $0x30] sm:$0xff]
    %v23 = vld [vmem:[%s0 + $0x38] sm:$0xff]
    %v24 = vld [vmem:[%s0 + $0x40] sm:$0xff]
    %v25 = vld [vmem:[%s0 + $0x48] sm:$0xff]
    %v26 = vld [vmem:[%s0 + $0x50] sm:$0xff]
    %v27 = vld [vmem:[%s0 + $0x58] sm:$0xff]
    %v28 = vld [vmem:[%s0 + $0x60] sm:$0xff]
    %v29 = vld [vmem:[%s0 + $0x68] sm:$0xff]
    %v30 = vld [vmem:[%s1] sm:$0x1]
    %vm31 = vcmask 916480
    %v33 = vsel %vm31, %v15, 0
    %35 = vmatprep.subr.mxu0 0.0
    %v36 = vand.u32 %v16, 4294901760
    %37 = vmatpush1.msra.mxu0 %v36
    %38 = vmatprep.subr.mxu0 0.0
    %v39 = vand.u32 %v17, 4294901760
    %40 = vmatpush1.msra.mxu0 %v39
    %41 = vmatprep.subr.mxu0 0.0
    %v42 = vand.u32 %v18, 4294901760
    %43 = vmatpush1.msra.mxu0 %v42
    %44 = vmatprep.subr.mxu0 0.0
    %v45 = vand.u32 %v19, 4294901760
    %46 = vmatpush1.msra.mxu0 %v45
    %47 = vmatprep.subr.mxu0 0.0
    %v48 = vand.u32 %v20, 4294901760
    %49 = vmatpush1.msra.mxu0 %v48
    %50 = vmatprep.subr.mxu0 0.0
    %v51 = vand.u32 %v21, 4294901760
    %52 = vmatpush1.msra.mxu0 %v51
    %53 = vmatprep.subr.mxu0 0.0
    %v54 = vand.u32 %v22, 4294901760
    %55 = vmatpush1.msra.mxu0 %v54
    %56 = vmatprep.subr.mxu0 0.0
    %v57 = vand.u32 %v23, 4294901760
    %58 = vmatpush1.msra.mxu0 %v57
    %59 = vmatprep.subr.mxu0 0.0
    %v60 = vand.u32 %v24, 4294901760
    %61 = vmatpush1.msra.mxu0 %v60
    %62 = vmatprep.subr.mxu0 0.0
    %v63 = vand.u32 %v25, 4294901760
    %64 = vmatpush1.msra.mxu0 %v63
    %65 = vmatprep.subr.mxu0 0.0
    %v66 = vand.u32 %v26, 4294901760
    %67 = vmatpush1.msra.mxu0 %v66
    %68 = vmatprep.subr.mxu0 0.0
    %v69 = vand.u32 %v27, 4294901760
    %70 = vmatpush1.msra.mxu0 %v69
    %71 = vmatprep.subr.mxu0 0.0
    %v72 = vand.u32 %v28, 4294901760
    %73 = vmatpush1.msra.mxu0 %v72
    %74 = vmatprep.subr.mxu0 0.0
    %v75 = vand.u32 %v29, 4294901760
    %76 = vmatpush1.msra.mxu0 %v75
    %77 = vmatprep.subr.mxu0 0.0
    %78 = vmatpush1.msra.mxu0 0.0
    %79 = vmatprep.subr.mxu0 0.0
    %80 = vmatpush1.msra.mxu0 0.0
    %81 = vmatprep.subr.mxu0 0.0
    %82 = vmatpush1.msra.mxu0 0.0
    %83 = vmatprep.subr.mxu0 0.0
    %84 = vmatpush1.msra.mxu0 0.0
    %85 = vmatprep.subr.mxu0 0.0
    %86 = vmatpush1.msra.mxu0 0.0
    %87 = vmatprep.subr.mxu0 0.0
    %88 = vmatpush1.msra.mxu0 0.0
    %89 = vmatprep.subr.mxu0 0.0
    %90 = vmatpush1.msra.mxu0 0.0
    %91 = vmatprep.subr.mxu0 0.0
    %92 = vmatpush1.msra.mxu0 0.0
    %93 = vmatprep.subr.mxu0 0.0
    %94 = vmatpush1.msra.mxu0 0.0
    %95 = vmatprep.subr.mxu0 0.0
    %96 = vmatpush1.msra.mxu0 0.0
    %97 = vmatprep.subr.mxu0 0.0
    %98 = vmatpush1.msra.mxu0 0.0
    %99 = vmatprep.subr.mxu0 0.0
    %100 = vmatpush1.msra.mxu0 0.0
    %101 = vmatprep.subr.mxu0 0.0
    %102 = vmatpush1.msra.mxu0 0.0
    %103 = vmatprep.subr.mxu0 0.0
    %104 = vmatpush1.msra.mxu0 0.0
    %105 = vmatprep.subr.mxu0 0.0
    %106 = vmatpush1.msra.mxu0 0.0
    %107 = vmatprep.subr.mxu0 0.0
    %108 = vmatpush1.msra.mxu0 0.0
    %109 = vmatprep.subr.mxu0 0.0
    %110 = vmatpush1.msra.mxu0 0.0
    %111 = vmatprep.subr.mxu0 0.0
    %112 = vmatpush1.msra.mxu0 0.0
    %113 = vmatprep.mubr.f32.mxu0 0.0
    %v114 = vand.u32 %v33, 4294901760
    %v115 = vsub.f32 %v33, %v114
    %v116 = vand.u32 %v115, 4294901760
    %v117 = vsub.f32 %v115, %v116
    %v118 = vand.u32 %v117, 4294901760
    %119 = vmatmul.mubr.f32.gmra.mrb[0].mxu0 %v118
    %v120 = vpop.f32.mrb[0].mxu0
    %v121 = vadd.f32 %v30, %v120
    %v122 = vpop.f32.mrb[0].mxu0
    %123 = vdwg.mxu0
    %124 = vmatprep.subr.mxu0 0.0
    %v125 = vand.u32 %v16, 4294901760
    %v126 = vsub.f32 %v16, %v125
    %v127 = vand.u32 %v126, 4294901760
    %v128 = vsub.f32 %v126, %v127
    %v129 = vand.u32 %v128, 4294901760
    %130 = vmatpush1.msra.mxu0 %v129
    %131 = vmatprep.subr.mxu0 0.0
    %v132 = vand.u32 %v17, 4294901760
    %v133 = vsub.f32 %v17, %v132
    %v134 = vand.u32 %v133, 4294901760
    %v135 = vsub.f32 %v133, %v134
    %v136 = vand.u32 %v135, 4294901760
    %137 = vmatpush1.msra.mxu0 %v136
    %138 = vmatprep.subr.mxu0 0.0
    %v139 = vand.u32 %v18, 4294901760
    %v140 = vsub.f32 %v18, %v139
    %v141 = vand.u32 %v140, 4294901760
    %v142 = vsub.f32 %v140, %v141
    %v143 = vand.u32 %v142, 4294901760
    %144 = vmatpush1.msra.mxu0 %v143
    %145 = vmatprep.subr.mxu0 0.0
    %v146 = vand.u32 %v19, 4294901760
    %v147 = vsub.f32 %v19, %v146
    %v148 = vand.u32 %v147, 4294901760
    %v149 = vsub.f32 %v147, %v148
    %v150 = vand.u32 %v149, 4294901760
    %151 = vmatpush1.msra.mxu0 %v150
    %152 = vmatprep.subr.mxu0 0.0
    %v153 = vand.u32 %v20, 4294901760
    %v154 = vsub.f32 %v20, %v153
    %v155 = vand.u32 %v154, 4294901760
    %v156 = vsub.f32 %v154, %v155
    %v157 = vand.u32 %v156, 4294901760
    %158 = vmatpush1.msra.mxu0 %v157
    %159 = vmatprep.subr.mxu0 0.0
    %v160 = vand.u32 %v21, 4294901760
    %v161 = vsub.f32 %v21, %v160
    %v162 = vand.u32 %v161, 4294901760
    %v163 = vsub.f32 %v161, %v162
    %v164 = vand.u32 %v163, 4294901760
    %165 = vmatpush1.msra.mxu0 %v164
    %166 = vmatprep.subr.mxu0 0.0
    %v167 = vand.u32 %v22, 4294901760
    %v168 = vsub.f32 %v22, %v167
    %v169 = vand.u32 %v168, 4294901760
    %v170 = vsub.f32 %v168, %v169
    %v171 = vand.u32 %v170, 4294901760
    %172 = vmatpush1.msra.mxu0 %v171
    %173 = vmatprep.subr.mxu0 0.0
    %v174 = vand.u32 %v23, 4294901760
    %v175 = vsub.f32 %v23, %v174
    %v176 = vand.u32 %v175, 4294901760
    %v177 = vsub.f32 %v175, %v176
    %v178 = vand.u32 %v177, 4294901760
    %179 = vmatpush1.msra.mxu0 %v178
    %180 = vmatprep.subr.mxu0 0.0
    %v181 = vand.u32 %v24, 4294901760
    %v182 = vsub.f32 %v24, %v181
    %v183 = vand.u32 %v182, 4294901760
    %v184 = vsub.f32 %v182, %v183
    %v185 = vand.u32 %v184, 4294901760
    %186 = vmatpush1.msra.mxu0 %v185
    %187 = vmatprep.subr.mxu0 0.0
    %v188 = vand.u32 %v25, 4294901760
    %v189 = vsub.f32 %v25, %v188
    %v190 = vand.u32 %v189, 4294901760
    %v191 = vsub.f32 %v189, %v190
    %v192 = vand.u32 %v191, 4294901760
    %193 = vmatpush1.msra.mxu0 %v192
    %194 = vmatprep.subr.mxu0 0.0
    %v195 = vand.u32 %v26, 4294901760
    %v196 = vsub.f32 %v26, %v195
    %v197 = vand.u32 %v196, 4294901760
    %v198 = vsub.f32 %v196, %v197
    %v199 = vand.u32 %v198, 4294901760
    %200 = vmatpush1.msra.mxu0 %v199
    %201 = vmatprep.subr.mxu0 0.0
    %v202 = vand.u32 %v27, 4294901760
    %v203 = vsub.f32 %v27, %v202
    %v204 = vand.u32 %v203, 4294901760
    %v205 = vsub.f32 %v203, %v204
    %v206 = vand.u32 %v205, 4294901760
    %207 = vmatpush1.msra.mxu0 %v206
    %208 = vmatprep.subr.mxu0 0.0
    %v209 = vand.u32 %v28, 4294901760
    %v210 = vsub.f32 %v28, %v209
    %v211 = vand.u32 %v210, 4294901760
    %v212 = vsub.f32 %v210, %v211
    %v213 = vand.u32 %v212, 4294901760
    %214 = vmatpush1.msra.mxu0 %v213
    %215 = vmatprep.subr.mxu0 0.0
    %v216 = vand.u32 %v29, 4294901760
    %v217 = vsub.f32 %v29, %v216
    %v218 = vand.u32 %v217, 4294901760
    %v219 = vsub.f32 %v217, %v218
    %v220 = vand.u32 %v219, 4294901760
    %221 = vmatpush1.msra.mxu0 %v220
    %222 = vmatprep.subr.mxu0 0.0
    %223 = vmatpush1.msra.mxu0 0.0
    %224 = vmatprep.subr.mxu0 0.0
    %225 = vmatpush1.msra.mxu0 0.0
    %226 = vmatprep.subr.mxu0 0.0
    %227 = vmatpush1.msra.mxu0 0.0
    %228 = vmatprep.subr.mxu0 0.0
    %229 = vmatpush1.msra.mxu0 0.0
    %230 = vmatprep.subr.mxu0 0.0
    %231 = vmatpush1.msra.mxu0 0.0
    %232 = vmatprep.subr.mxu0 0.0
    %233 = vmatpush1.msra.mxu0 0.0
    %234 = vmatprep.subr.mxu0 0.0
    %235 = vmatpush1.msra.mxu0 0.0
    %236 = vmatprep.subr.mxu0 0.0
    %237 = vmatpush1.msra.mxu0 0.0
    %238 = vmatprep.subr.mxu0 0.0
    %239 = vmatpush1.msra.mxu0 0.0
    %240 = vmatprep.subr.mxu0 0.0
    %241 = vmatpush1.msra.mxu0 0.0
    %242 = vmatprep.subr.mxu0 0.0
    %243 = vmatpush1.msra.mxu0 0.0
    %244 = vmatprep.subr.mxu0 0.0
    %245 = vmatpush1.msra.mxu0 0.0
    %246 = vmatprep.subr.mxu0 0.0
    %247 = vmatpush1.msra.mxu0 0.0
    %248 = vmatprep.subr.mxu0 0.0
    %249 = vmatpush1.msra.mxu0 0.0
    %250 = vmatprep.subr.mxu0 0.0
    %251 = vmatpush1.msra.mxu0 0.0
    %252 = vmatprep.subr.mxu0 0.0
    %253 = vmatpush1.msra.mxu0 0.0
    %254 = vmatprep.subr.mxu0 0.0
    %255 = vmatpush1.msra.mxu0 0.0
    %256 = vmatprep.subr.mxu0 0.0
    %257 = vmatpush1.msra.mxu0 0.0
    %258 = vmatprep.mubr.f32.mxu0 0.0
    %v259 = vand.u32 %v33, 4294901760
    %260 = vmatmul.mubr.f32.gmra.mrb[0].mxu0 %v259
    %v261 = vpop.f32.mrb[0].mxu0
    %v262 = vadd.f32 %v121, %v261
    %v263 = vpop.f32.mrb[0].mxu0
    %264 = vdwg.mxu0
    %265 = vmatprep.subr.mxu0 0.0
    %v266 = vand.u32 %v16, 4294901760
    %v267 = vsub.f32 %v16, %v266
    %268 = vmatpush1.msra.mxu0 %v267
    %269 = vmatprep.subr.mxu0 0.0
    %v270 = vand.u32 %v17, 4294901760
    %v271 = vsub.f32 %v17, %v270
    %272 = vmatpush1.msra.mxu0 %v271
    %273 = vmatprep.subr.mxu0 0.0
    %v274 = vand.u32 %v18, 4294901760
    %v275 = vsub.f32 %v18, %v274
    %276 = vmatpush1.msra.mxu0 %v275
    %277 = vmatprep.subr.mxu0 0.0
    %v278 = vand.u32 %v19, 4294901760
    %v279 = vsub.f32 %v19, %v278
    %280 = vmatpush1.msra.mxu0 %v279
    %281 = vmatprep.subr.mxu0 0.0
    %v282 = vand.u32 %v20, 4294901760
    %v283 = vsub.f32 %v20, %v282
    %284 = vmatpush1.msra.mxu0 %v283
    %285 = vmatprep.subr.mxu0 0.0
    %v286 = vand.u32 %v21, 4294901760
    %v287 = vsub.f32 %v21, %v286
    %288 = vmatpush1.msra.mxu0 %v287
    %289 = vmatprep.subr.mxu0 0.0
    %v290 = vand.u32 %v22, 4294901760
    %v291 = vsub.f32 %v22, %v290
    %292 = vmatpush1.msra.mxu0 %v291
    %293 = vmatprep.subr.mxu0 0.0
    %v294 = vand.u32 %v23, 4294901760
    %v295 = vsub.f32 %v23, %v294
    %296 = vmatpush1.msra.mxu0 %v295
    %297 = vmatprep.subr.mxu0 0.0
    %v298 = vand.u32 %v24, 4294901760
    %v299 = vsub.f32 %v24, %v298
    %300 = vmatpush1.msra.mxu0 %v299
    %301 = vmatprep.subr.mxu0 0.0
    %v302 = vand.u32 %v25, 4294901760
    %v303 = vsub.f32 %v25, %v302
    %304 = vmatpush1.msra.mxu0 %v303
    %305 = vmatprep.subr.mxu0 0.0
    %v306 = vand.u32 %v26, 4294901760
    %v307 = vsub.f32 %v26, %v306
    %308 = vmatpush1.msra.mxu0 %v307
    %309 = vmatprep.subr.mxu0 0.0
    %v310 = vand.u32 %v27, 4294901760
    %v311 = vsub.f32 %v27, %v310
    %312 = vmatpush1.msra.mxu0 %v311
    %313 = vmatprep.subr.mxu0 0.0
    %v314 = vand.u32 %v28, 4294901760
    %v315 = vsub.f32 %v28, %v314
    %316 = vmatpush1.msra.mxu0 %v315
    %317 = vmatprep.subr.mxu0 0.0
    %v318 = vand.u32 %v29, 4294901760
    %v319 = vsub.f32 %v29, %v318
    %320 = vmatpush1.msra.mxu0 %v319
    %321 = vmatprep.subr.mxu0 0.0
    %322 = vmatpush1.msra.mxu0 0.0
    %323 = vmatprep.subr.mxu0 0.0
    %324 = vmatpush1.msra.mxu0 0.0
    %325 = vmatprep.subr.mxu0 0.0
    %326 = vmatpush1.msra.mxu0 0.0
    %327 = vmatprep.subr.mxu0 0.0
    %328 = vmatpush1.msra.mxu0 0.0
    %329 = vmatprep.subr.mxu0 0.0
    %330 = vmatpush1.msra.mxu0 0.0
    %331 = vmatprep.subr.mxu0 0.0
    %332 = vmatpush1.msra.mxu0 0.0
    %333 = vmatprep.subr.mxu0 0.0
    %334 = vmatpush1.msra.mxu0 0.0
    %335 = vmatprep.subr.mxu0 0.0
    %336 = vmatpush1.msra.mxu0 0.0
    %337 = vmatprep.subr.mxu0 0.0
    %338 = vmatpush1.msra.mxu0 0.0
    %339 = vmatprep.subr.mxu0 0.0
    %340 = vmatpush1.msra.mxu0 0.0
    %341 = vmatprep.subr.mxu0 0.0
    %342 = vmatpush1.msra.mxu0 0.0
    %343 = vmatprep.subr.mxu0 0.0
    %344 = vmatpush1.msra.mxu0 0.0
    %345 = vmatprep.subr.mxu0 0.0
    %346 = vmatpush1.msra.mxu0 0.0
    %347 = vmatprep.subr.mxu0 0.0
    %348 = vmatpush1.msra.mxu0 0.0
    %349 = vmatprep.subr.mxu0 0.0
    %350 = vmatpush1.msra.mxu0 0.0
    %351 = vmatprep.subr.mxu0 0.0
    %352 = vmatpush1.msra.mxu0 0.0
    %353 = vmatprep.subr.mxu0 0.0
    %354 = vmatpush1.msra.mxu0 0.0
    %355 = vmatprep.subr.mxu0 0.0
    %356 = vmatpush1.msra.mxu0 0.0
    %357 = vmatprep.mubr.f32.mxu0 0.0
    %v358 = vand.u32 %v33, 4294901760
    %v359 = vsub.f32 %v33, %v358
    %360 = vmatmul.mubr.f32.gmra.mrb[0].mxu0 %v359
    %v361 = vpop.f32.mrb[0].mxu0
    %v362 = vadd.f32 %v262, %v361
    %v363 = vpop.f32.mrb[0].mxu0
    %364 = vdwg.mxu0
    %365 = vmatprep.subr.mxu0 0.0
    %v366 = vand.u32 %v16, 4294901760
    %367 = vmatpush1.msra.mxu0 %v366
    %368 = vmatprep.subr.mxu0 0.0
    %v369 = vand.u32 %v17, 4294901760
    %370 = vmatpush1.msra.mxu0 %v369
    %371 = vmatprep.subr.mxu0 0.0
    %v372 = vand.u32 %v18, 4294901760
    %373 = vmatpush1.msra.mxu0 %v372
    %374 = vmatprep.subr.mxu0 0.0
    %v375 = vand.u32 %v19, 4294901760
    %376 = vmatpush1.msra.mxu0 %v375
    %377 = vmatprep.subr.mxu0 0.0
    %v378 = vand.u32 %v20, 4294901760
    %379 = vmatpush1.msra.mxu0 %v378
    %380 = vmatprep.subr.mxu0 0.0
    %v381 = vand.u32 %v21, 4294901760
    %382 = vmatpush1.msra.mxu0 %v381
    %383 = vmatprep.subr.mxu0 0.0
    %v384 = vand.u32 %v22, 4294901760
    %385 = vmatpush1.msra.mxu0 %v384
    %386 = vmatprep.subr.mxu0 0.0
    %v387 = vand.u32 %v23, 4294901760
    %388 = vmatpush1.msra.mxu0 %v387
    %389 = vmatprep.subr.mxu0 0.0
    %v390 = vand.u32 %v24, 4294901760
    %391 = vmatpush1.msra.mxu0 %v390
    %392 = vmatprep.subr.mxu0 0.0
    %v393 = vand.u32 %v25, 4294901760
    %394 = vmatpush1.msra.mxu0 %v393
    %395 = vmatprep.subr.mxu0 0.0
    %v396 = vand.u32 %v26, 4294901760
    %397 = vmatpush1.msra.mxu0 %v396
    %398 = vmatprep.subr.mxu0 0.0
    %v399 = vand.u32 %v27, 4294901760
    %400 = vmatpush1.msra.mxu0 %v399
    %401 = vmatprep.subr.mxu0 0.0
    %v402 = vand.u32 %v28, 4294901760
    %403 = vmatpush1.msra.mxu0 %v402
    %404 = vmatprep.subr.mxu0 0.0
    %v405 = vand.u32 %v29, 4294901760
    %406 = vmatpush1.msra.mxu0 %v405
    %407 = vmatprep.subr.mxu0 0.0
    %408 = vmatpush1.msra.mxu0 0.0
    %409 = vmatprep.subr.mxu0 0.0
    %410 = vmatpush1.msra.mxu0 0.0
    %411 = vmatprep.subr.mxu0 0.0
    %412 = vmatpush1.msra.mxu0 0.0
    %413 = vmatprep.subr.mxu0 0.0
    %414 = vmatpush1.msra.mxu0 0.0
    %415 = vmatprep.subr.mxu0 0.0
    %416 = vmatpush1.msra.mxu0 0.0
    %417 = vmatprep.subr.mxu0 0.0
    %418 = vmatpush1.msra.mxu0 0.0
    %419 = vmatprep.subr.mxu0 0.0
    %420 = vmatpush1.msra.mxu0 0.0
    %421 = vmatprep.subr.mxu0 0.0
    %422 = vmatpush1.msra.mxu0 0.0
    %423 = vmatprep.subr.mxu0 0.0
    %424 = vmatpush1.msra.mxu0 0.0
    %425 = vmatprep.subr.mxu0 0.0
    %426 = vmatpush1.msra.mxu0 0.0
    %427 = vmatprep.subr.mxu0 0.0
    %428 = vmatpush1.msra.mxu0 0.0
    %429 = vmatprep.subr.mxu0 0.0
    %430 = vmatpush1.msra.mxu0 0.0
    %431 = vmatprep.subr.mxu0 0.0
    %432 = vmatpush1.msra.mxu0 0.0
    %433 = vmatprep.subr.mxu0 0.0
    %434 = vmatpush1.msra.mxu0 0.0
    %435 = vmatprep.subr.mxu0 0.0
    %436 = vmatpush1.msra.mxu0 0.0
    %437 = vmatprep.subr.mxu0 0.0
    %438 = vmatpush1.msra.mxu0 0.0
    %439 = vmatprep.subr.mxu0 0.0
    %440 = vmatpush1.msra.mxu0 0.0
    %441 = vmatprep.subr.mxu0 0.0
    %442 = vmatpush1.msra.mxu0 0.0
    %443 = vmatprep.mubr.f32.mxu0 0.0
    %v444 = vand.u32 %v33, 4294901760
    %v445 = vsub.f32 %v33, %v444
    %v446 = vand.u32 %v445, 4294901760
    %447 = vmatmul.mubr.f32.gmra.mrb[0].mxu0 %v446
    %v448 = vpop.f32.mrb[0].mxu0
    %v449 = vadd.f32 %v362, %v448
    %v450 = vpop.f32.mrb[0].mxu0
    %451 = vdwg.mxu0
    %452 = vmatprep.subr.mxu0 0.0
    %v453 = vand.u32 %v16, 4294901760
    %v454 = vsub.f32 %v16, %v453
    %v455 = vand.u32 %v454, 4294901760
    %456 = vmatpush1.msra.mxu0 %v455
    %457 = vmatprep.subr.mxu0 0.0
    %v458 = vand.u32 %v17, 4294901760
    %v459 = vsub.f32 %v17, %v458
    %v460 = vand.u32 %v459, 4294901760
    %461 = vmatpush1.msra.mxu0 %v460
    %462 = vmatprep.subr.mxu0 0.0
    %v463 = vand.u32 %v18, 4294901760
    %v464 = vsub.f32 %v18, %v463
    %v465 = vand.u32 %v464, 4294901760
    %466 = vmatpush1.msra.mxu0 %v465
    %467 = vmatprep.subr.mxu0 0.0
    %v468 = vand.u32 %v19, 4294901760
    %v469 = vsub.f32 %v19, %v468
    %v470 = vand.u32 %v469, 4294901760
    %471 = vmatpush1.msra.mxu0 %v470
    %472 = vmatprep.subr.mxu0 0.0
    %v473 = vand.u32 %v20, 4294901760
    %v474 = vsub.f32 %v20, %v473
    %v475 = vand.u32 %v474, 4294901760
    %476 = vmatpush1.msra.mxu0 %v475
    %477 = vmatprep.subr.mxu0 0.0
    %v478 = vand.u32 %v21, 4294901760
    %v479 = vsub.f32 %v21, %v478
    %v480 = vand.u32 %v479, 4294901760
    %481 = vmatpush1.msra.mxu0 %v480
    %482 = vmatprep.subr.mxu0 0.0
    %v483 = vand.u32 %v22, 4294901760
    %v484 = vsub.f32 %v22, %v483
    %v485 = vand.u32 %v484, 4294901760
    %486 = vmatpush1.msra.mxu0 %v485
    %487 = vmatprep.subr.mxu0 0.0
    %v488 = vand.u32 %v23, 4294901760
    %v489 = vsub.f32 %v23, %v488
    %v490 = vand.u32 %v489, 4294901760
    %491 = vmatpush1.msra.mxu0 %v490
    %492 = vmatprep.subr.mxu0 0.0
    %v493 = vand.u32 %v24, 4294901760
    %v494 = vsub.f32 %v24, %v493
    %v495 = vand.u32 %v494, 4294901760
    %496 = vmatpush1.msra.mxu0 %v495
    %497 = vmatprep.subr.mxu0 0.0
    %v498 = vand.u32 %v25, 4294901760
    %v499 = vsub.f32 %v25, %v498
    %v500 = vand.u32 %v499, 4294901760
    %501 = vmatpush1.msra.mxu0 %v500
    %502 = vmatprep.subr.mxu0 0.0
    %v503 = vand.u32 %v26, 4294901760
    %v504 = vsub.f32 %v26, %v503
    %v505 = vand.u32 %v504, 4294901760
    %506 = vmatpush1.msra.mxu0 %v505
    %507 = vmatprep.subr.mxu0 0.0
    %v508 = vand.u32 %v27, 4294901760
    %v509 = vsub.f32 %v27, %v508
    %v510 = vand.u32 %v509, 4294901760
    %511 = vmatpush1.msra.mxu0 %v510
    %512 = vmatprep.subr.mxu0 0.0
    %v513 = vand.u32 %v28, 4294901760
    %v514 = vsub.f32 %v28, %v513
    %v515 = vand.u32 %v514, 4294901760
    %516 = vmatpush1.msra.mxu0 %v515
    %517 = vmatprep.subr.mxu0 0.0
    %v518 = vand.u32 %v29, 4294901760
    %v519 = vsub.f32 %v29, %v518
    %v520 = vand.u32 %v519, 4294901760
    %521 = vmatpush1.msra.mxu0 %v520
    %522 = vmatprep.subr.mxu0 0.0
    %523 = vmatpush1.msra.mxu0 0.0
    %524 = vmatprep.subr.mxu0 0.0
    %525 = vmatpush1.msra.mxu0 0.0
    %526 = vmatprep.subr.mxu0 0.0
    %527 = vmatpush1.msra.mxu0 0.0
    %528 = vmatprep.subr.mxu0 0.0
    %529 = vmatpush1.msra.mxu0 0.0
    %530 = vmatprep.subr.mxu0 0.0
    %531 = vmatpush1.msra.mxu0 0.0
    %532 = vmatprep.subr.mxu0 0.0
    %533 = vmatpush1.msra.mxu0 0.0
    %534 = vmatprep.subr.mxu0 0.0
    %535 = vmatpush1.msra.mxu0 0.0
    %536 = vmatprep.subr.mxu0 0.0
    %537 = vmatpush1.msra.mxu0 0.0
    %538 = vmatprep.subr.mxu0 0.0
    %539 = vmatpush1.msra.mxu0 0.0
    %540 = vmatprep.subr.mxu0 0.0
    %541 = vmatpush1.msra.mxu0 0.0
    %542 = vmatprep.subr.mxu0 0.0
    %543 = vmatpush1.msra.mxu0 0.0
    %544 = vmatprep.subr.mxu0 0.0
    %545 = vmatpush1.msra.mxu0 0.0
    %546 = vmatprep.subr.mxu0 0.0
    %547 = vmatpush1.msra.mxu0 0.0
    %548 = vmatprep.subr.mxu0 0.0
    %549 = vmatpush1.msra.mxu0 0.0
    %550 = vmatprep.subr.mxu0 0.0
    %551 = vmatpush1.msra.mxu0 0.0
    %552 = vmatprep.subr.mxu0 0.0
    %553 = vmatpush1.msra.mxu0 0.0
    %554 = vmatprep.subr.mxu0 0.0
    %555 = vmatpush1.msra.mxu0 0.0
    %556 = vmatprep.subr.mxu0 0.0
    %557 = vmatpush1.msra.mxu0 0.0
    %558 = vmatprep.mubr.f32.mxu0 0.0
    %v559 = vand.u32 %v33, 4294901760
    %560 = vmatmul.mubr.f32.gmra.mrb[0].mxu0 %v559
    %v561 = vpop.f32.mrb[0].mxu0
    %v562 = vadd.f32 %v449, %v561
    %v563 = vpop.f32.mrb[0].mxu0
    %564 = vdwg.mxu0
    %565 = vmatprep.subr.mxu0 0.0
    %v566 = vand.u32 %v16, 4294901760
    %567 = vmatpush1.msra.mxu0 %v566
    %568 = vmatprep.subr.mxu0 0.0
    %v569 = vand.u32 %v17, 4294901760
    %570 = vmatpush1.msra.mxu0 %v569
    %571 = vmatprep.subr.mxu0 0.0
    %v572 = vand.u32 %v18, 4294901760
    %573 = vmatpush1.msra.mxu0 %v572
    %574 = vmatprep.subr.mxu0 0.0
    %v575 = vand.u32 %v19, 4294901760
    %576 = vmatpush1.msra.mxu0 %v575
    %577 = vmatprep.subr.mxu0 0.0
    %v578 = vand.u32 %v20, 4294901760
    %579 = vmatpush1.msra.mxu0 %v578
    %580 = vmatprep.subr.mxu0 0.0
    %v581 = vand.u32 %v21, 4294901760
    %582 = vmatpush1.msra.mxu0 %v581
    %583 = vmatprep.subr.mxu0 0.0
    %v584 = vand.u32 %v22, 4294901760
    %585 = vmatpush1.msra.mxu0 %v584
    %586 = vmatprep.subr.mxu0 0.0
    %v587 = vand.u32 %v23, 4294901760
    %588 = vmatpush1.msra.mxu0 %v587
    %589 = vmatprep.subr.mxu0 0.0
    %v590 = vand.u32 %v24, 4294901760
    %591 = vmatpush1.msra.mxu0 %v590
    %592 = vmatprep.subr.mxu0 0.0
    %v593 = vand.u32 %v25, 4294901760
    %594 = vmatpush1.msra.mxu0 %v593
    %595 = vmatprep.subr.mxu0 0.0
    %v596 = vand.u32 %v26, 4294901760
    %597 = vmatpush1.msra.mxu0 %v596
    %598 = vmatprep.subr.mxu0 0.0
    %v599 = vand.u32 %v27, 4294901760
    %600 = vmatpush1.msra.mxu0 %v599
    %601 = vmatprep.subr.mxu0 0.0
    %v602 = vand.u32 %v28, 4294901760
    %603 = vmatpush1.msra.mxu0 %v602
    %604 = vmatprep.subr.mxu0 0.0
    %v605 = vand.u32 %v29, 4294901760
    %606 = vmatpush1.msra.mxu0 %v605
    %607 = vmatprep.subr.mxu0 0.0
    %608 = vmatpush1.msra.mxu0 0.0
    %609 = vmatprep.subr.mxu0 0.0
    %610 = vmatpush1.msra.mxu0 0.0
    %611 = vmatprep.subr.mxu0 0.0
    %612 = vmatpush1.msra.mxu0 0.0
    %613 = vmatprep.subr.mxu0 0.0
    %614 = vmatpush1.msra.mxu0 0.0
    %615 = vmatprep.subr.mxu0 0.0
    %616 = vmatpush1.msra.mxu0 0.0
    %617 = vmatprep.subr.mxu0 0.0
    %618 = vmatpush1.msra.mxu0 0.0
    %619 = vmatprep.subr.mxu0 0.0
    %620 = vmatpush1.msra.mxu0 0.0
    %621 = vmatprep.subr.mxu0 0.0
    %622 = vmatpush1.msra.mxu0 0.0
    %623 = vmatprep.subr.mxu0 0.0
    %624 = vmatpush1.msra.mxu0 0.0
    %625 = vmatprep.subr.mxu0 0.0
    %626 = vmatpush1.msra.mxu0 0.0
    %627 = vmatprep.subr.mxu0 0.0
    %628 = vmatpush1.msra.mxu0 0.0
    %629 = vmatprep.subr.mxu0 0.0
    %630 = vmatpush1.msra.mxu0 0.0
    %631 = vmatprep.subr.mxu0 0.0
    %632 = vmatpush1.msra.mxu0 0.0
    %633 = vmatprep.subr.mxu0 0.0
    %634 = vmatpush1.msra.mxu0 0.0
    %635 = vmatprep.subr.mxu0 0.0
    %636 = vmatpush1.msra.mxu0 0.0
    %637 = vmatprep.subr.mxu0 0.0
    %638 = vmatpush1.msra.mxu0 0.0
    %639 = vmatprep.subr.mxu0 0.0
    %640 = vmatpush1.msra.mxu0 0.0
    %641 = vmatprep.subr.mxu0 0.0
    %642 = vmatpush1.msra.mxu0 0.0
    %643 = vmatprep.mubr.f32.mxu0 0.0
    %v644 = vand.u32 %v33, 4294901760
    %645 = vmatmul.mubr.f32.gmra.mrb[0].mxu0 %v644
    %v646 = vpop.f32.mrb[0].mxu0
    %v647 = vadd.f32 %v562, %v646
    %v648 = vpop.f32.mrb[0].mxu0
    %649 = vdwg.mxu0
    %vm650 = vcmask 57344
    %651 = vst.msk [vmem:[#allocation2] sm:$0x1] %vm650, %v647
    // Predicated region
    $region14: #{bayesian_linear_regression_forward.1} parent=1 // pred_check
      _
    $region15: #{bayesian_linear_regression_forward.1} parent=1 // pred_check_branch
      %653 = sbr.rel (0) target = $region17
    $region16: #{bayesian_linear_regression_forward.1} parent=1 // pred_region
      %s655 = ssub.s32 16, 16
      %656 = vsyncadd [#allocation3], %s655
      %s658 = sshll.u32 [#allocation2], 4
      %s659 = int_to_ptr.vmem [resolvable:$true] %s658
      %661 = dma.vmem_to_hbm [thread:$0]  %s659, 16, %s3, [#allocation3]
    $region17: #{bayesian_linear_regression_forward.1} parent=1 // pred_fallthru
      _
    // Predicated region
    $region18: #{bayesian_linear_regression_forward.1} parent=1 // pred_check
      _
    $region19: #{bayesian_linear_regression_forward.1} parent=1 // pred_check_branch
      %663 = sbr.rel (0) target = $region21
    $region20: #{bayesian_linear_regression_forward.1} parent=1 // pred_region
      %664 = dma.done [#allocation3], 16
    $region21: #{bayesian_linear_regression_forward.1} parent=1 // pred_fallthru
      _
    %665 = vsyncpa [#allocation3], 1

</llo_original>
